<compile_context>
chip_gen: v7x
topology: tpu7x:2x2x1
jax: 0.10.0
libtpu: 0.0.40
codegen_flags: <defaults>
</compile_context>

<pallas_src>
import math
import numpy as np
import jax
import jax.numpy as jnp
from jax.experimental import pallas as pl
from jax.experimental.pallas import tpu as pltpu


# ---------------------------------------------------------------------------
# Static matrices encoding AdaptiveAvgPool1d / linear upsample.
# ---------------------------------------------------------------------------
def _adaptive_pool_matrix(pool, length):
    """(pool, length) matrix M s.t. M @ x == AdaptiveAvgPool1d(pool)(x)."""
    m = np.zeros((pool, length), np.float32)
    for p in range(pool):
        start = (p * length) // pool
        end = -((-(p + 1) * length) // pool)  # ceil((p+1)*L/pool)
        m[p, start:end] = 1.0 / (end - start)
    return m


def _linear_upsample_matrix(pool, length):
    """(length, pool) matrix A s.t. A @ y == F.interpolate(y, size=length,
    mode='linear', align_corners=False)."""
    a = np.zeros((length, pool), np.float32)
    scale = pool / length
    for i in range(length):
        src = max((i + 0.5) * scale - 0.5, 0.0)
        lo = int(math.floor(src))
        hi = lo + 1 if lo < pool - 1 else lo
        w = src - lo
        a[i, lo] += 1.0 - w
        a[i, hi] += w
    return a


# Column ownership inside the packed "7" axis: branch 0 -> col 0,
# branch 1 -> cols 1..2, branch 2 -> cols 3..6.
_BRANCH_OF_COL = np.array([0, 1, 1, 2, 2, 2, 2], np.int32)


# ---------------------------------------------------------------------------
# Pallas kernel: one grid step handles `bt` batch elements, batch folded
# into the matmul M axis.  All blocks are 2-D (rows = (batch, channel)).
# ---------------------------------------------------------------------------
def _sppm_kernel(x_ref, pmatT_ref, wbr_ref, mask_ref, sbr_ref, wtap_ref,
                 a3_ref, sout_ref, out_ref):
    cdt = pmatT_ref.dtype                       # matmul operand dtype (f32/bf16)
    rows_out = wtap_ref.shape[1]                # bt * Cout
    length = out_ref.shape[-1]

    # 1) Adaptive pooling for all branches & all batch elements: one matmul
    #    (M = bt*Cin, K = L, N = 7).  f32 accumulation.
    pooled = jnp.dot(x_ref[...].astype(cdt), pmatT_ref[...],
                     preferred_element_type=jnp.float32)        # (bt*Cin, 7)
    pooled = pooled.astype(cdt)

    # 2) Branch 1x1 convs (BN scale folded) merged across branches AND batch:
    #    block-mask the three pooled replicas so each branch only contributes
    #    to its own columns of the packed "7" axis, then ONE matmul with the
    #    packed batch-block-diagonal weight (bt*Cout, 3*bt*Cin).
    m = mask_ref[...]                                            # (3, 7), 0/1
    rep = jnp.concatenate([pooled * m[i:i + 1, :] for i in range(3)],
                          axis=0)                                # (3*bt*Cin, 7)
    y = jnp.dot(wbr_ref[...], rep,
                preferred_element_type=jnp.float32)              # (bt*Cout, 7)
    y = jnp.maximum(y + sbr_ref[...], 0.0).astype(cdt)           # shift + ReLU (f32)

    # 3) Conv1d(k=3, pad=1) + BN-scale folded into the linear upsample:
    #    per-tap channel mixing with one packed matmul, then three accumulating
    #    (bt*Cout, 7) x (7, L) matmuls against the shifted/zero-padded upsample
    #    matrices (zero padding is baked into a3, so no rolls / boundary masks
    #    and the `fusion` tensor is never materialised).
    z = jnp.dot(wtap_ref[...], y,
                preferred_element_type=jnp.float32).astype(cdt)  # (3*bt*Cout, 7)
    acc = jnp.zeros((rows_out, length), jnp.float32)
    for t in range(3):
        acc = acc + jnp.dot(z[t * rows_out:(t + 1) * rows_out, :], a3_ref[t],
                            preferred_element_type=jnp.float32)  # (bt*Cout, L)

    out_ref[...] = jnp.maximum(acc + sout_ref[...], 0.0).astype(out_ref.dtype)


# ---------------------------------------------------------------------------
# batch_tile derivation: largest divisor of B that fits a conservative VMEM
# budget (safe on v7x's 64 MiB/TC) while keeping >= 2 grid steps (so v7x's two
# TensorCores both get work via the "parallel" batch axis).
# ---------------------------------------------------------------------------
def _pick_batch_tile(b, c_in, c_out, length, x_itemsize, out_itemsize,
                     compute_itemsize, vmem_budget_bytes, min_grid_steps=2):
    best = 1
    for bt in range(1, b + 1):
        if b % bt:
            continue
        if b >= min_grid_steps and (b // bt) < min_grid_steps:
            continue
        # double-buffered input / output blocks
        io = 2 * bt * length * (c_in * x_itemsize + c_out * out_itemsize)
        # double-buffered weight operands (pmatT, a3, packed block-diag weights)
        w = 2 * compute_itemsize * (7 * length + 3 * 7 * length
                                    + 3 * bt * bt * c_out * c_in
                                    + 3 * bt * bt * c_out * c_out)
        w += 2 * 4 * (bt * c_out * 8 + 32)          # f32 shifts + mask
        # rough in-kernel intermediates (f32 accumulator + cast input copy)
        tmp = bt * c_out * length * 4 + bt * c_in * length * compute_itemsize
        if io + w + tmp <= vmem_budget_bytes:
            best = bt
    return best


# ---------------------------------------------------------------------------
# Kernel operand construction (depends on L and the chosen batch tile).
# BN scales are folded into the conv weights; only per-channel shifts remain.
# ---------------------------------------------------------------------------
def _build_operands(raw, length, bt, compute_dtype):
    # Static pooling / upsample matrices.
    pmat = np.concatenate([_adaptive_pool_matrix(p, length) for p in (1, 2, 4)],
                          axis=0)                                  # (7, L)
    amat = np.concatenate([_linear_upsample_matrix(p, length) for p in (1, 2, 4)],
                          axis=1)                                  # (L, 7)
    # a3[t, p, l] = amat[l - 1 + t, p] with zeros outside [0, L)  (conv zero pad).
    a3 = np.zeros((3, 7, length), np.float32)
    a3[0, :, 1:] = amat[:length - 1, :].T
    a3[1, :, :] = amat.T
    a3[2, :, :length - 1] = amat[1:, :].T
    # Branch column masks on the packed "7" axis.
    mask7 = np.zeros((3, 7), np.float32)
    for p in range(7):
        mask7[_BRANCH_OF_COL[p], p] = 1.0

    w1x1, wk3 = raw["w1x1"], raw["wk3"]            # (3,Cout,Cin), (Cout,Cout,3)
    bn_scale, bn_shift = raw["bn_scale"], raw["bn_shift"]          # (4, Cout)
    c_out = w1x1.shape[1]

    eye = jnp.eye(bt, dtype=jnp.float32)
    # Branch 1x1 weights with BN scale folded, packed over branches and made
    # batch-block-diagonal: (bt*Cout, 3*bt*Cin).
    wbr = bn_scale[:3, :, None] * w1x1
    wbr_pk = jnp.concatenate([jnp.kron(eye, wbr[i]) for i in range(3)], axis=1)
    # conv_out k=3 tap weights with BN scale folded, stacked over taps and
    # batch-block-diagonal: (3*bt*Cout, bt*Cout).
    wk3f = bn_scale[3][:, None, None] * wk3
    wtap_pk = jnp.concatenate([jnp.kron(eye, wk3f[:, :, t]) for t in range(3)],
                              axis=0)
    # Per-channel BN shifts (kept in f32 for the VPU).
    shift7 = bn_shift[:3][_BRANCH_OF_COL, :].T                     # (Cout, 7)
    shift_br = jnp.tile(shift7, (bt, 1))                           # (bt*Cout, 7)
    shift_out = jnp.tile(bn_shift[3][:, None], (bt, 1))            # (bt*Cout, 1)

    return dict(
        pmatT=jnp.asarray(pmat.T, dtype=compute_dtype),            # (L, 7)
        a3=jnp.asarray(a3, dtype=compute_dtype),                   # (3, 7, L)
        mask7=jnp.asarray(mask7, dtype=compute_dtype),             # (3, 7)
        wbr_pk=wbr_pk.astype(compute_dtype),
        wtap_pk=wtap_pk.astype(compute_dtype),
        shift_br=shift_br.astype(jnp.float32),
        shift_out=shift_out.astype(jnp.float32),
    )


# ---------------------------------------------------------------------------
# Wrapper: batch grid, no layout transposes, no batch padding.
# ---------------------------------------------------------------------------
def sppm_forward(x_ncl, raw, *, compute_dtype=jnp.float32,
                 vmem_budget_bytes=16 << 20):
    """x_ncl: (B, Cin, L) in PyTorch NCL layout.  Returns (B, Cout, L).

    On v6e/v7x pass bf16 inputs + compute_dtype=jnp.bfloat16 (f32 accumulation
    is kept via preferred_element_type).  For lane-dense stores keep L a
    multiple of 128 and Cin/Cout multiples of 8.
    """
    b, c_in, length = x_ncl.shape
    c_out = raw["w1x1"].shape[1]

    bt = _pick_batch_tile(
        b, c_in, c_out, length,
        x_itemsize=x_ncl.dtype.itemsize,
        out_itemsize=x_ncl.dtype.itemsize,
        compute_itemsize=jnp.dtype(compute_dtype).itemsize,
        vmem_budget_bytes=vmem_budget_bytes)
    ops = _build_operands(raw, length, bt, compute_dtype)

    # Free, contiguous reshapes: batch folded into the sublane (row) axis.
    x2d = x_ncl.reshape(b * c_in, length)

    out2d = pl.pallas_call(
        _sppm_kernel,
        out_shape=jax.ShapeDtypeStruct((b * c_out, length), x_ncl.dtype),
        grid=(b // bt,),
        in_specs=[
            pl.BlockSpec((bt * c_in, length), lambda i: (i, 0)),          # x
            pl.BlockSpec((length, 7), lambda i: (0, 0)),                  # pooling^T
            pl.BlockSpec((bt * c_out, 3 * bt * c_in), lambda i: (0, 0)),  # branch 1x1 (packed)
            pl.BlockSpec((3, 7), lambda i: (0, 0)),                       # branch column masks
            pl.BlockSpec((bt * c_out, 7), lambda i: (0, 0)),              # branch BN shifts
            pl.BlockSpec((3 * bt * c_out, bt * c_out), lambda i: (0, 0)), # k=3 taps (packed)
            pl.BlockSpec((3, 7, length), lambda i: (0, 0, 0)),            # padded upsample^T
            pl.BlockSpec((bt * c_out, 1), lambda i: (0, 0)),              # output BN shift
        ],
        out_specs=pl.BlockSpec((bt * c_out, length), lambda i: (i, 0)),
        compiler_params=pltpu.CompilerParams(
            dimension_semantics=("parallel",),
            vmem_limit_bytes=32 * 1024 * 1024),
        # Note: weight operands have constant index maps; pl.Buffered(1) on
        # them would halve their VMEM footprint (only matters at large Cout).
    )(x2d, ops["pmatT"], ops["wbr_pk"], ops["mask7"], ops["shift_br"],
      ops["wtap_pk"], ops["a3"], ops["shift_out"])

    return out2d.reshape(b, c_out, length)


# ---------------------------------------------------------------------------
# Parameter construction: raw (PyTorch-equivalent) params only; everything
# kernel-specific (folding, packing, static matrices) happens in the wrapper.
# ---------------------------------------------------------------------------
def make_params(key, c_in, c_out, eps=1e-5):
    ks = jax.random.split(key, 6)
    w1x1 = jax.random.normal(ks[0], (3, c_out, c_in), jnp.float32) * 0.2
    wk3 = jax.random.normal(ks[1], (c_out, c_out, 3), jnp.float32) * 0.2
    gamma = jax.random.uniform(ks[2], (4, c_out), jnp.float32, 0.5, 1.5)
    beta = jax.random.normal(ks[3], (4, c_out), jnp.float32) * 0.1
    rmean = jax.random.normal(ks[4], (4, c_out), jnp.float32) * 0.1
    rvar = jax.random.uniform(ks[5], (4, c_out), jnp.float32, 0.5, 1.5)
    bn_scale = gamma / jnp.sqrt(rvar + eps)
    bn_shift = beta - rmean * bn_scale
    return dict(w1x1=w1x1, wk3=wk3, bn_scale=bn_scale, bn_shift=bn_shift)


# ---------------------------------------------------------------------------
# Pure-JAX reference (same math as the PyTorch module, unfolded params).
# ---------------------------------------------------------------------------
def sppm_ref(x_ncl, raw):
    x = x_ncl.astype(jnp.float32)
    length = x.shape[-1]
    hi = jax.lax.Precision.HIGHEST
    fusion = 0.0
    for idx, p in enumerate((1, 2, 4)):
        pm = jnp.asarray(_adaptive_pool_matrix(p, length))      # (p, L)
        am = jnp.asarray(_linear_upsample_matrix(p, length))    # (L, p)
        pooled = jnp.einsum("bcl,pl->bcp", x, pm, precision=hi)
        y = jnp.einsum("oc,bcp->bop", raw["w1x1"][idx], pooled, precision=hi)
        y = jax.nn.relu(y * raw["bn_scale"][idx][None, :, None]
                        + raw["bn_shift"][idx][None, :, None])
        fusion = fusion + jnp.einsum("bop,lp->bol", y, am, precision=hi)
    pad = jnp.pad(fusion, ((0, 0), (0, 0), (1, 1)))
    conv = sum(jnp.einsum("oc,bcl->bol", raw["wk3"][:, :, k],
                          pad[:, :, k:k + length], precision=hi)
               for k in range(3))
    return jax.nn.relu(conv * raw["bn_scale"][3][None, :, None]
                       + raw["bn_shift"][3][None, :, None])


if __name__ == "__main__":
    # TPU-friendly small shapes: L multiple of 128 (lane-dense stores),
    # channels multiples of 8 (sublane-aligned row folding).
    B, C_IN, C_OUT, L = 4, 8, 16, 128
    key = jax.random.PRNGKey(0)
    kx, kp = jax.random.split(key)
    x = jax.random.normal(kx, (B, C_IN, L), jnp.float32)   # PyTorch NCL input
    raw = make_params(kp, C_IN, C_OUT)

    # f32 path (v5e-friendly).
    out = jax.block_until_ready(sppm_forward(x, raw))
    ref = sppm_ref(x, raw)
    assert out.shape == (B, C_OUT, L), out.shape
    np.testing.assert_allclose(np.asarray(out), np.asarray(ref),
                               rtol=1e-2, atol=1e-2)

    # bf16 operand path (recommended on v6e/v7x): bf16 IO + MXU operands,
    # f32 accumulation and f32 elementwise; looser tolerance for bf16 inputs.
    out_bf = jax.block_until_ready(
        sppm_forward(x.astype(jnp.bfloat16), raw, compute_dtype=jnp.bfloat16))
    np.testing.assert_allclose(np.asarray(out_bf.astype(jnp.float32)),
                               np.asarray(ref), rtol=1e-1, atol=5e-2)

    print("KERNEL_OK")
</pallas_src>

<mosaic_0001>
module attributes {stable_mosaic.version = 11 : i64} {
  func.func @_sppm_kernel(%arg0: i32, %arg1: memref<16x128xf32, #tpu.memory_space<vmem>>, %arg2: memref<128x7xf32, #tpu.memory_space<vmem>>, %arg3: memref<32x48xf32, #tpu.memory_space<vmem>>, %arg4: memref<3x7xf32, #tpu.memory_space<vmem>>, %arg5: memref<32x7xf32, #tpu.memory_space<vmem>>, %arg6: memref<96x32xf32, #tpu.memory_space<vmem>>, %arg7: memref<3x7x128xf32, #tpu.memory_space<vmem>>, %arg8: memref<32x1xf32, #tpu.memory_space<vmem>>, %arg9: memref<32x128xf32, #tpu.memory_space<vmem>>) attributes {dimension_semantics = [#tpu.dimension_semantics<parallel>], iteration_bounds = array<i64: 2>, scalar_prefetch = 0 : i64, scratch_operands = 0 : i64, tpu.core_type = #tpu.core_type<tc>, window_params = [{transform_indices = @transform_0, window_bounds = array<i64: 16, 128>}, {pipeline_mode = #tpu.pipeline_mode<synchronous>, transform_indices = @transform_1, window_bounds = array<i64: 128, 7>}, {pipeline_mode = #tpu.pipeline_mode<synchronous>, transform_indices = @transform_2, window_bounds = array<i64: 32, 48>}, {pipeline_mode = #tpu.pipeline_mode<synchronous>, transform_indices = @transform_3, window_bounds = array<i64: 3, 7>}, {pipeline_mode = #tpu.pipeline_mode<synchronous>, transform_indices = @transform_4, window_bounds = array<i64: 32, 7>}, {pipeline_mode = #tpu.pipeline_mode<synchronous>, transform_indices = @transform_5, window_bounds = array<i64: 96, 32>}, {pipeline_mode = #tpu.pipeline_mode<synchronous>, transform_indices = @transform_6, window_bounds = array<i64: 3, 7, 128>}, {pipeline_mode = #tpu.pipeline_mode<synchronous>, transform_indices = @transform_7, window_bounds = array<i64: 32, 1>}, {transform_indices = @transform_8, window_bounds = array<i64: 32, 128>}]} {
    %c0 = arith.constant 0 : index
    %c0_0 = arith.constant 0 : index
    %0 = vector.load %arg1[%c0, %c0_0] : memref<16x128xf32, #tpu.memory_space<vmem>>, vector<16x128xf32>
    %c0_1 = arith.constant 0 : index
    %c0_2 = arith.constant 0 : index
    %1 = vector.load %arg2[%c0_1, %c0_2] : memref<128x7xf32, #tpu.memory_space<vmem>>, vector<128x7xf32>
    %cst = arith.constant dense<0.000000e+00> : vector<16x7xf32>
    %2 = tpu.matmul %0, %1, %cst {dimension_numbers = #tpu.dot_dimension_numbers<[1], [0], [0], [1], [0, 0, 1, 1], [], []>} : vector<16x128xf32>, vector<128x7xf32>, vector<16x7xf32> -> vector<16x7xf32>
    %c0_3 = arith.constant 0 : index
    %c0_4 = arith.constant 0 : index
    %3 = vector.load %arg4[%c0_3, %c0_4] : memref<3x7xf32, #tpu.memory_space<vmem>>, vector<3x7xf32>
    %4 = vector.extract_strided_slice %3 {offsets = [0, 0], sizes = [1, 7], strides = [1, 1]} : vector<3x7xf32> to vector<1x7xf32>
    %5 = vector.broadcast %4 : vector<1x7xf32> to vector<16x7xf32>
    %6 = arith.mulf %2, %5 : vector<16x7xf32>
    %7 = vector.extract_strided_slice %3 {offsets = [1, 0], sizes = [1, 7], strides = [1, 1]} : vector<3x7xf32> to vector<1x7xf32>
    %8 = vector.broadcast %7 : vector<1x7xf32> to vector<16x7xf32>
    %9 = arith.mulf %2, %8 : vector<16x7xf32>
    %10 = vector.extract_strided_slice %3 {offsets = [2, 0], sizes = [1, 7], strides = [1, 1]} : vector<3x7xf32> to vector<1x7xf32>
    %11 = vector.broadcast %10 : vector<1x7xf32> to vector<16x7xf32>
    %12 = arith.mulf %2, %11 : vector<16x7xf32>
    %13 = tpu.concatenate %6, %9, %12 in 0 : vector<16x7xf32>, vector<16x7xf32>, vector<16x7xf32> -> vector<48x7xf32>
    %c0_5 = arith.constant 0 : index
    %c0_6 = arith.constant 0 : index
    %14 = vector.load %arg3[%c0_5, %c0_6] : memref<32x48xf32, #tpu.memory_space<vmem>>, vector<32x48xf32>
    %cst_7 = arith.constant dense<0.000000e+00> : vector<32x7xf32>
    %15 = tpu.matmul %14, %13, %cst_7 {dimension_numbers = #tpu.dot_dimension_numbers<[1], [0], [0], [1], [0, 0, 1, 1], [], []>} : vector<32x48xf32>, vector<48x7xf32>, vector<32x7xf32> -> vector<32x7xf32>
    %c0_8 = arith.constant 0 : index
    %c0_9 = arith.constant 0 : index
    %16 = vector.load %arg5[%c0_8, %c0_9] : memref<32x7xf32, #tpu.memory_space<vmem>>, vector<32x7xf32>
    %17 = arith.addf %15, %16 : vector<32x7xf32>
    %cst_10 = arith.constant 0.000000e+00 : f32
    %18 = vector.broadcast %cst_10 : f32 to vector<32x7xf32>
    %19 = arith.maximumf %17, %18 : vector<32x7xf32>
    %c0_11 = arith.constant 0 : index
    %c0_12 = arith.constant 0 : index
    %20 = vector.load %arg6[%c0_11, %c0_12] : memref<96x32xf32, #tpu.memory_space<vmem>>, vector<96x32xf32>
    %cst_13 = arith.constant dense<0.000000e+00> : vector<96x7xf32>
    %21 = tpu.matmul %20, %19, %cst_13 {dimension_numbers = #tpu.dot_dimension_numbers<[1], [0], [0], [1], [0, 0, 1, 1], [], []>} : vector<96x32xf32>, vector<32x7xf32>, vector<96x7xf32> -> vector<96x7xf32>
    %cst_14 = arith.constant 0.000000e+00 : f32
    %22 = vector.broadcast %cst_14 : f32 to vector<32x128xf32>
    %23 = vector.extract_strided_slice %21 {offsets = [0, 0], sizes = [32, 7], strides = [1, 1]} : vector<96x7xf32> to vector<32x7xf32>
    %c0_15 = arith.constant 0 : index
    %c0_16 = arith.constant 0 : index
    %c0_17 = arith.constant 0 : index
    %24 = vector.load %arg7[%c0_15, %c0_16, %c0_17] : memref<3x7x128xf32, #tpu.memory_space<vmem>>, vector<1x7x128xf32>
    %25 = vector.shape_cast %24 : vector<1x7x128xf32> to vector<7x128xf32>
    %cst_18 = arith.constant dense<0.000000e+00> : vector<32x128xf32>
    %26 = tpu.matmul %23, %25, %cst_18 {dimension_numbers = #tpu.dot_dimension_numbers<[1], [0], [0], [1], [0, 0, 1, 1], [], []>} : vector<32x7xf32>, vector<7x128xf32>, vector<32x128xf32> -> vector<32x128xf32>
    %27 = arith.addf %22, %26 : vector<32x128xf32>
    %28 = vector.extract_strided_slice %21 {offsets = [32, 0], sizes = [32, 7], strides = [1, 1]} : vector<96x7xf32> to vector<32x7xf32>
    %c1 = arith.constant 1 : index
    %c0_19 = arith.constant 0 : index
    %c0_20 = arith.constant 0 : index
    %29 = vector.load %arg7[%c1, %c0_19, %c0_20] : memref<3x7x128xf32, #tpu.memory_space<vmem>>, vector<1x7x128xf32>
    %30 = vector.shape_cast %29 : vector<1x7x128xf32> to vector<7x128xf32>
    %cst_21 = arith.constant dense<0.000000e+00> : vector<32x128xf32>
    %31 = tpu.matmul %28, %30, %cst_21 {dimension_numbers = #tpu.dot_dimension_numbers<[1], [0], [0], [1], [0, 0, 1, 1], [], []>} : vector<32x7xf32>, vector<7x128xf32>, vector<32x128xf32> -> vector<32x128xf32>
    %32 = arith.addf %27, %31 : vector<32x128xf32>
    %33 = vector.extract_strided_slice %21 {offsets = [64, 0], sizes = [32, 7], strides = [1, 1]} : vector<96x7xf32> to vector<32x7xf32>
    %c2 = arith.constant 2 : index
    %c0_22 = arith.constant 0 : index
    %c0_23 = arith.constant 0 : index
    %34 = vector.load %arg7[%c2, %c0_22, %c0_23] : memref<3x7x128xf32, #tpu.memory_space<vmem>>, vector<1x7x128xf32>
    %35 = vector.shape_cast %34 : vector<1x7x128xf32> to vector<7x128xf32>
    %cst_24 = arith.constant dense<0.000000e+00> : vector<32x128xf32>
    %36 = tpu.matmul %33, %35, %cst_24 {dimension_numbers = #tpu.dot_dimension_numbers<[1], [0], [0], [1], [0, 0, 1, 1], [], []>} : vector<32x7xf32>, vector<7x128xf32>, vector<32x128xf32> -> vector<32x128xf32>
    %37 = arith.addf %32, %36 : vector<32x128xf32>
    %c0_25 = arith.constant 0 : index
    %c0_26 = arith.constant 0 : index
    %38 = vector.load %arg8[%c0_25, %c0_26] : memref<32x1xf32, #tpu.memory_space<vmem>>, vector<32x1xf32>
    %39 = vector.broadcast %38 : vector<32x1xf32> to vector<32x128xf32>
    %40 = arith.addf %37, %39 : vector<32x128xf32>
    %cst_27 = arith.constant 0.000000e+00 : f32
    %41 = vector.broadcast %cst_27 : f32 to vector<32x128xf32>
    %42 = arith.maximumf %40, %41 : vector<32x128xf32>
    %c0_28 = arith.constant 0 : index
    %c0_29 = arith.constant 0 : index
    %43 = vector.load %arg9[%c0_28, %c0_29] : memref<32x128xf32, #tpu.memory_space<vmem>>, vector<32x128xf32>
    tpu.vector_store %arg9[%c0_28, %c0_29], %42 {strides = array<i32>} : memref<32x128xf32, #tpu.memory_space<vmem>>, vector<32x128xf32>,
    return
  }
  func.func @transform_0(%arg0: i32) -> (i32, i32) {
    %c0_i32 = arith.constant 0 : i32
    %c0_i32_0 = arith.constant 0 : i32
    return %arg0, %c0_i32 : i32, i32
  }
  func.func @transform_1(%arg0: i32) -> (i32, i32) {
    %c0_i32 = arith.constant 0 : i32
    %c0_i32_0 = arith.constant 0 : i32
    %c0_i32_1 = arith.constant 0 : i32
    return %c0_i32, %c0_i32_0 : i32, i32
  }
  func.func @transform_2(%arg0: i32) -> (i32, i32) {
    %c0_i32 = arith.constant 0 : i32
    %c0_i32_0 = arith.constant 0 : i32
    %c0_i32_1 = arith.constant 0 : i32
    return %c0_i32, %c0_i32_0 : i32, i32
  }
  func.func @transform_3(%arg0: i32) -> (i32, i32) {
    %c0_i32 = arith.constant 0 : i32
    %c0_i32_0 = arith.constant 0 : i32
    %c0_i32_1 = arith.constant 0 : i32
    return %c0_i32, %c0_i32_0 : i32, i32
  }
  func.func @transform_4(%arg0: i32) -> (i32, i32) {
    %c0_i32 = arith.constant 0 : i32
    %c0_i32_0 = arith.constant 0 : i32
    %c0_i32_1 = arith.constant 0 : i32
    return %c0_i32, %c0_i32_0 : i32, i32
  }
  func.func @transform_5(%arg0: i32) -> (i32, i32) {
    %c0_i32 = arith.constant 0 : i32
    %c0_i32_0 = arith.constant 0 : i32
    %c0_i32_1 = arith.constant 0 : i32
    return %c0_i32, %c0_i32_0 : i32, i32
  }
  func.func @transform_6(%arg0: i32) -> (i32, i32, i32) {
    %c0_i32 = arith.constant 0 : i32
    %c0_i32_0 = arith.constant 0 : i32
    %c0_i32_1 = arith.constant 0 : i32
    %c0_i32_2 = arith.constant 0 : i32
    return %c0_i32, %c0_i32_0, %c0_i32_1 : i32, i32, i32
  }
  func.func @transform_7(%arg0: i32) -> (i32, i32) {
    %c0_i32 = arith.constant 0 : i32
    %c0_i32_0 = arith.constant 0 : i32
    %c0_i32_1 = arith.constant 0 : i32
    return %c0_i32, %c0_i32_0 : i32, i32
  }
  func.func @transform_8(%arg0: i32) -> (i32, i32) {
    %c0_i32 = arith.constant 0 : i32
    %c0_i32_0 = arith.constant 0 : i32
    return %arg0, %c0_i32 : i32, i32
  }
}

</mosaic_0001>

<llo_original>
// kernel: tpu_custom_call.1
$region0: #{tpu_custom_call.1}
  #allocation0 [shape = 'u32[]', space=smem, size = 0x4, offset = 0x4, fixed_abs, tag = 'smem constant byte address 0x4 - core index']
  #allocation1 [shape = 'u32[144,128]{1,0:T(1,128)}', space=vmem, size = 0x12000, scoped, tag = 'internal scratch']
  %s0 = inlined_call_operand.vmem [shape: f32[32,128], index: 0, kind: input, shape index: {}]
  %s1 = inlined_call_operand.vmem [shape: f32[128,7], index: 1, kind: input, shape index: {}]
  %s2 = inlined_call_operand.vmem [shape: f32[32,48], index: 2, kind: input, shape index: {}]
  %s3 = inlined_call_operand.vmem [shape: f32[3,7], index: 3, kind: input, shape index: {}]
  %s4 = inlined_call_operand.vmem [shape: f32[32,7], index: 4, kind: input, shape index: {}]
  %s5 = inlined_call_operand.vmem [shape: f32[96,32], index: 5, kind: input, shape index: {}]
  %s6 = inlined_call_operand.vmem [shape: f32[3,7,128], index: 6, kind: input, shape index: {}]
  %s7 = inlined_call_operand.vmem [shape: f32[32,1], index: 7, kind: input, shape index: {}]
  %s8 = inlined_call_operand.hbm [shape: f32[64,128], index: 8, kind: output, shape index: {}]
  %s9 = sld [smem:[#allocation0]]
  $region65: #{tpu_custom_call.1} parent=0
    _
  %s11 = ssub.s32 1, %s9
  %s12 = scalar_select 0, %s11, %s9
  $region1: #{tpu_custom_call.1} parent=0
    #allocation2 [shape = 'u8[32768]{0}', space=vmem, size = 0x8000, scoped, tag = 'output window, operand 0']
    #allocation3 [shape = 's32[2]{0}', space=sflag, size = 0x8, scoped, tag = 'scoped memory for tpu_custom_call.1']
    %13 = vsyncpa [#allocation3], 0
    %s14 = scalar_lea.sflag [#allocation3], 1
    %15 = vsyncpa %s14, 0
    loop: start=0, step=1, limit=4
    $region2: #{tpu_custom_call.1} parent=1 // loop_pre_header
      _
    $region3: #{tpu_custom_call.1} parent=1 // loop_header
      %s17 = sphi 0, %s21
      %p18 = scmp.ge.s32.totalorder %s17, 4
      %s27 = sphi 0, %s29
      %s30 = sphi 0, %s27
      %s31 = sphi 0, %s30
      %s47 = sphi 0, %s31
      %s51 = sphi 0, %s51
      %s53 = sphi 0, %s51
      %s54 = sphi 0, %s53
      %s68 = sphi 0, %s54
      %s72 = sphi 0, %s72
      %s74 = sphi 0, %s72
      %s75 = sphi 0, %s74
      %s89 = sphi 0, %s75
      %s93 = sphi 0, %s93
      %s95 = sphi 0, %s93
      %s96 = sphi 0, %s95
      %s110 = sphi 0, %s96
      %s114 = sphi 0, %s114
      %s116 = sphi 0, %s114
      %s117 = sphi 0, %s116
      %s131 = sphi 0, %s117
      %s135 = sphi 0, %s135
      %s137 = sphi 0, %s135
      %s138 = sphi 0, %s137
      %s152 = sphi 0, %s138
      %s156 = sphi 0, %s156
      %s158 = sphi 0, %s156
      %s159 = sphi 0, %s158
      %s173 = sphi 0, %s159
      %s177 = sphi 0, %s177
      %s179 = sphi 0, %s177
      %s180 = sphi 0, %s179
      %s194 = sphi 0, %s180
      %s200 = sphi 0, %s202
      %s203 = sphi 0, %s200
      %s204 = sphi 0, %s203
      %s220 = sphi 0, %s204
    $region4: #{tpu_custom_call.1} parent=1 // loop_header_branch
      %20 = sbr.rel (%p18) target = $region8
    $region5: #{tpu_custom_call.1} parent=1 // loop_body
      %s22 = ssub.s32 %s17, 1
      %s23 = ssub.s32 %s17, 2
      %s24 = sadd.s32 %s17, 1
      %s25 = ssub.s32 %s17, %s24
      %p26 = scmp.eq.s32.totalorder %s25, 0
      %s28 = sadd.s32 %s27, 1
      %s29 = scalar_select %p26, %s27, %s28
      %p32 = pneg %p26
      %p33 = scmp.eq.s32.totalorder %s17, 1
      %p34 = por %p32, %p33
      %p35 = scmp.ne.s32.totalorder %s27, %s30
      %p36 = scmp.eq.s32.totalorder %s17, 0
      %p37 = por %p35, %p36
      %p38 = scmp.ne.s32.totalorder %s27, %s30
      %p39 = scmp.eq.s32.totalorder %s22, 1
      %p40 = por %p38, %p39
      %p41 = scmp.ne.s32.totalorder %s30, %s31
      %p42 = scmp.eq.s32.totalorder %s22, 0
      %p43 = por %p41, %p42
      %p44 = scmp.ne.s32.totalorder %s30, %s31
      %p45 = scmp.eq.s32.totalorder %s23, 1
      %p46 = por %p44, %p45
      %p48 = scmp.ne.s32.totalorder %s31, %s47
      %p49 = scmp.eq.s32.totalorder %s23, 0
      %p50 = por %p48, %p49
      %s52 = sadd.s32 %s51, 1
      %p55 = scmp.eq.s32.totalorder %s17, 1
      %p56 = scmp.ne.s32.totalorder %s51, %s53
      %p57 = scmp.eq.s32.totalorder %s17, 0
      %p58 = por %p56, %p57
      %p59 = scmp.ne.s32.totalorder %s51, %s53
      %p60 = scmp.eq.s32.totalorder %s22, 1
      %p61 = por %p59, %p60
      %p62 = scmp.ne.s32.totalorder %s53, %s54
      %p63 = scmp.eq.s32.totalorder %s22, 0
      %p64 = por %p62, %p63
      %p65 = scmp.ne.s32.totalorder %s53, %s54
      %p66 = scmp.eq.s32.totalorder %s23, 1
      %p67 = por %p65, %p66
      %p69 = scmp.ne.s32.totalorder %s54, %s68
      %p70 = scmp.eq.s32.totalorder %s23, 0
      %p71 = por %p69, %p70
      %s73 = sadd.s32 %s72, 1
      %p76 = scmp.eq.s32.totalorder %s17, 1
      %p77 = scmp.ne.s32.totalorder %s72, %s74
      %p78 = scmp.eq.s32.totalorder %s17, 0
      %p79 = por %p77, %p78
      %p80 = scmp.ne.s32.totalorder %s72, %s74
      %p81 = scmp.eq.s32.totalorder %s22, 1
      %p82 = por %p80, %p81
      %p83 = scmp.ne.s32.totalorder %s74, %s75
      %p84 = scmp.eq.s32.totalorder %s22, 0
      %p85 = por %p83, %p84
      %p86 = scmp.ne.s32.totalorder %s74, %s75
      %p87 = scmp.eq.s32.totalorder %s23, 1
      %p88 = por %p86, %p87
      %p90 = scmp.ne.s32.totalorder %s75, %s89
      %p91 = scmp.eq.s32.totalorder %s23, 0
      %p92 = por %p90, %p91
      %s94 = sadd.s32 %s93, 1
      %p97 = scmp.eq.s32.totalorder %s17, 1
      %p98 = scmp.ne.s32.totalorder %s93, %s95
      %p99 = scmp.eq.s32.totalorder %s17, 0
      %p100 = por %p98, %p99
      %p101 = scmp.ne.s32.totalorder %s93, %s95
      %p102 = scmp.eq.s32.totalorder %s22, 1
      %p103 = por %p101, %p102
      %p104 = scmp.ne.s32.totalorder %s95, %s96
      %p105 = scmp.eq.s32.totalorder %s22, 0
      %p106 = por %p104, %p105
      %p107 = scmp.ne.s32.totalorder %s95, %s96
      %p108 = scmp.eq.s32.totalorder %s23, 1
      %p109 = por %p107, %p108
      %p111 = scmp.ne.s32.totalorder %s96, %s110
      %p112 = scmp.eq.s32.totalorder %s23, 0
      %p113 = por %p111, %p112
      %s115 = sadd.s32 %s114, 1
      %p118 = scmp.eq.s32.totalorder %s17, 1
      %p119 = scmp.ne.s32.totalorder %s114, %s116
      %p120 = scmp.eq.s32.totalorder %s17, 0
      %p121 = por %p119, %p120
      %p122 = scmp.ne.s32.totalorder %s114, %s116
      %p123 = scmp.eq.s32.totalorder %s22, 1
      %p124 = por %p122, %p123
      %p125 = scmp.ne.s32.totalorder %s116, %s117
      %p126 = scmp.eq.s32.totalorder %s22, 0
      %p127 = por %p125, %p126
      %p128 = scmp.ne.s32.totalorder %s116, %s117
      %p129 = scmp.eq.s32.totalorder %s23, 1
      %p130 = por %p128, %p129
      %p132 = scmp.ne.s32.totalorder %s117, %s131
      %p133 = scmp.eq.s32.totalorder %s23, 0
      %p134 = por %p132, %p133
      %s136 = sadd.s32 %s135, 1
      %p139 = scmp.eq.s32.totalorder %s17, 1
      %p140 = scmp.ne.s32.totalorder %s135, %s137
      %p141 = scmp.eq.s32.totalorder %s17, 0
      %p142 = por %p140, %p141
      %p143 = scmp.ne.s32.totalorder %s135, %s137
      %p144 = scmp.eq.s32.totalorder %s22, 1
      %p145 = por %p143, %p144
      %p146 = scmp.ne.s32.totalorder %s137, %s138
      %p147 = scmp.eq.s32.totalorder %s22, 0
      %p148 = por %p146, %p147
      %p149 = scmp.ne.s32.totalorder %s137, %s138
      %p150 = scmp.eq.s32.totalorder %s23, 1
      %p151 = por %p149, %p150
      %p153 = scmp.ne.s32.totalorder %s138, %s152
      %p154 = scmp.eq.s32.totalorder %s23, 0
      %p155 = por %p153, %p154
      %s157 = sadd.s32 %s156, 1
      %p160 = scmp.eq.s32.totalorder %s17, 1
      %p161 = scmp.ne.s32.totalorder %s156, %s158
      %p162 = scmp.eq.s32.totalorder %s17, 0
      %p163 = por %p161, %p162
      %p164 = scmp.ne.s32.totalorder %s156, %s158
      %p165 = scmp.eq.s32.totalorder %s22, 1
      %p166 = por %p164, %p165
      %p167 = scmp.ne.s32.totalorder %s158, %s159
      %p168 = scmp.eq.s32.totalorder %s22, 0
      %p169 = por %p167, %p168
      %p170 = scmp.ne.s32.totalorder %s158, %s159
      %p171 = scmp.eq.s32.totalorder %s23, 1
      %p172 = por %p170, %p171
      %p174 = scmp.ne.s32.totalorder %s159, %s173
      %p175 = scmp.eq.s32.totalorder %s23, 0
      %p176 = por %p174, %p175
      %s178 = sadd.s32 %s177, 1
      %p181 = scmp.eq.s32.totalorder %s17, 1
      %p182 = scmp.ne.s32.totalorder %s177, %s179
      %p183 = scmp.eq.s32.totalorder %s17, 0
      %p184 = por %p182, %p183
      %p185 = scmp.ne.s32.totalorder %s177, %s179
      %p186 = scmp.eq.s32.totalorder %s22, 1
      %p187 = por %p185, %p186
      %p188 = scmp.ne.s32.totalorder %s179, %s180
      %p189 = scmp.eq.s32.totalorder %s22, 0
      %p190 = por %p188, %p189
      %p191 = scmp.ne.s32.totalorder %s179, %s180
      %p192 = scmp.eq.s32.totalorder %s23, 1
      %p193 = por %p191, %p192
      %p195 = scmp.ne.s32.totalorder %s180, %s194
      %p196 = scmp.eq.s32.totalorder %s23, 0
      %p197 = por %p195, %p196
      %s198 = ssub.s32 %s17, %s24
      %p199 = scmp.eq.s32.totalorder %s198, 0
      %s201 = sadd.s32 %s200, 1
      %s202 = scalar_select %p199, %s200, %s201
      %p205 = pneg %p199
      %p206 = scmp.eq.s32.totalorder %s17, 1
      %p207 = por %p205, %p206
      %p208 = scmp.ne.s32.totalorder %s200, %s203
      %p209 = scmp.eq.s32.totalorder %s17, 0
      %p210 = por %p208, %p209
      %p211 = scmp.ne.s32.totalorder %s200, %s203
      %p212 = scmp.eq.s32.totalorder %s22, 1
      %p213 = por %p211, %p212
      %p214 = scmp.ne.s32.totalorder %s203, %s204
      %p215 = scmp.eq.s32.totalorder %s22, 0
      %p216 = por %p214, %p215
      %p217 = scmp.ne.s32.totalorder %s203, %s204
      %p218 = scmp.eq.s32.totalorder %s23, 1
      %p219 = por %p217, %p218
      %p221 = scmp.ne.s32.totalorder %s204, %s220
      %p222 = scmp.eq.s32.totalorder %s23, 0
      %p223 = por %p221, %p222
      %p224 = scmp.le.s32.totalorder 1, %s17
      %p225 = scmp.lt.s32.totalorder %s17, 3
      %p226 = pnand %p224, %p225
      %p227 = pneg %p226
      // Predicated region
      $region9: #{tpu_custom_call.1} parent=5 // pred_check
        _
      $region10: #{tpu_custom_call.1} parent=5 // pred_check_branch
        %229 = sbr.rel (%p226) target = $region12
      $region11: #{tpu_custom_call.1} parent=5 // pred_region
        %s230 = ssub.s32 %s17, 1
        // Predicated region
        $region13: #{tpu_custom_call.1} parent=11 // pred_check
          %p231 = pneg %p64
        $region14: #{tpu_custom_call.1} parent=11 // pred_check_branch
          %233 = sbr.rel (%p231) target = $region16
        $region15: #{tpu_custom_call.1} parent=11 // pred_region
          _
        $region16: #{tpu_custom_call.1} parent=11 // pred_fallthru
          _
        // Predicated region
        $region17: #{tpu_custom_call.1} parent=11 // pred_check
          %p234 = pneg %p85
        $region18: #{tpu_custom_call.1} parent=11 // pred_check_branch
          %236 = sbr.rel (%p234) target = $region20
        $region19: #{tpu_custom_call.1} parent=11 // pred_region
          _
        $region20: #{tpu_custom_call.1} parent=11 // pred_fallthru
          _
        // Predicated region
        $region21: #{tpu_custom_call.1} parent=11 // pred_check
          %p237 = pneg %p106
        $region22: #{tpu_custom_call.1} parent=11 // pred_check_branch
          %239 = sbr.rel (%p237) target = $region24
        $region23: #{tpu_custom_call.1} parent=11 // pred_region
          _
        $region24: #{tpu_custom_call.1} parent=11 // pred_fallthru
          _
        // Predicated region
        $region25: #{tpu_custom_call.1} parent=11 // pred_check
          %p240 = pneg %p127
        $region26: #{tpu_custom_call.1} parent=11 // pred_check_branch
          %242 = sbr.rel (%p240) target = $region28
        $region27: #{tpu_custom_call.1} parent=11 // pred_region
          _
        $region28: #{tpu_custom_call.1} parent=11 // pred_fallthru
          _
        // Predicated region
        $region29: #{tpu_custom_call.1} parent=11 // pred_check
          %p243 = pneg %p148
        $region30: #{tpu_custom_call.1} parent=11 // pred_check_branch
          %245 = sbr.rel (%p243) target = $region32
        $region31: #{tpu_custom_call.1} parent=11 // pred_region
          _
        $region32: #{tpu_custom_call.1} parent=11 // pred_fallthru
          _
        // Predicated region
        $region33: #{tpu_custom_call.1} parent=11 // pred_check
          %p246 = pneg %p169
        $region34: #{tpu_custom_call.1} parent=11 // pred_check_branch
          %248 = sbr.rel (%p246) target = $region36
        $region35: #{tpu_custom_call.1} parent=11 // pred_region
          _
        $region36: #{tpu_custom_call.1} parent=11 // pred_fallthru
          _
        // Predicated region
        $region37: #{tpu_custom_call.1} parent=11 // pred_check
          %p249 = pneg %p190
        $region38: #{tpu_custom_call.1} parent=11 // pred_check_branch
          %251 = sbr.rel (%p249) target = $region40
        $region39: #{tpu_custom_call.1} parent=11 // pred_region
          _
        $region40: #{tpu_custom_call.1} parent=11 // pred_fallthru
          _
      $region12: #{tpu_custom_call.1} parent=5 // pred_fallthru
        _
      %p252 = scmp.lt.s32.totalorder %s17, 2
      // Predicated region
      $region41: #{tpu_custom_call.1} parent=5 // pred_check
        %p253 = pneg %p252
      $region42: #{tpu_custom_call.1} parent=5 // pred_check_branch
        %255 = sbr.rel (%p253) target = $region44
      $region43: #{tpu_custom_call.1} parent=5 // pred_region
        // Predicated region
        $region45: #{tpu_custom_call.1} parent=43 // pred_check
          %p256 = pneg %p37
        $region46: #{tpu_custom_call.1} parent=43 // pred_check_branch
          %258 = sbr.rel (%p256) target = $region48
        $region47: #{tpu_custom_call.1} parent=43 // pred_region
          %s259 = smul.u32 2, %s17
          %p260 = scmp.lt.s32.totalorder %s259, 3
          %s261 = scalar_select %p260, %s259, 3
          %s262 = smul.addr %s261, 8
          %s263 = scalar_lea.vmem %s0, %s262
          %s264 = smul.u32 2, %s17
        $region48: #{tpu_custom_call.1} parent=43 // pred_fallthru
          _
      $region44: #{tpu_custom_call.1} parent=5 // pred_fallthru
        _
      %p265 = scmp.le.s32.totalorder 1, %s17
      %p266 = scmp.lt.s32.totalorder %s17, 3
      %p267 = pnand %p265, %p266
      %p268 = pneg %p267
      // Predicated region
      $region49: #{tpu_custom_call.1} parent=5 // pred_check
        _
      $region50: #{tpu_custom_call.1} parent=5 // pred_check_branch
        %270 = sbr.rel (%p267) target = $region52
      $region51: #{tpu_custom_call.1} parent=5 // pred_region
        %s271 = ssub.s32 %s17, 1
        %s272 = smul.u32 2, %s22
        %p273 = scmp.lt.s32.totalorder %s272, 3
        %s274 = scalar_select %p273, %s272, 3
        %s275 = smul.addr %s274, 8
        %s276 = scalar_lea.vmem %s0, %s275
        %p277 = pneg %p43
        %p278 = pneg %p40
        %p279 = pneg %p64
        %p280 = pneg %p61
        %p281 = pneg %p85
        %p282 = pneg %p82
        %p283 = pneg %p106
        %p284 = pneg %p103
        %p285 = pneg %p127
        %p286 = pneg %p124
        %p287 = pneg %p148
        %p288 = pneg %p145
        %p289 = pneg %p169
        %p290 = pneg %p166
        %p291 = pneg %p190
        %p292 = pneg %p187
        %p293 = pneg %p216
        %p294 = pneg %p213
        %s295 = sand.u32 %s203, 1
        %s296 = scalar_lea.sflag [#allocation3], %s295
        %s297 = sand.u32 %s203, 1
        %s298 = smul.addr %s297, 32
        %s299 = scalar_lea.vmem [#allocation2], %s298
        %s300 = smul.u32 2, %s22
        %p301 = scmp.lt.s32.totalorder %s300, 3
        %s302 = scalar_select %p301, %s300, 3
        %s303 = smul.addr %s302, 8
        %s304 = scalar_lea.vmem %s0, %s303
        %s305 = smul.u32 2, %s22
        %s306 = smul.u32 4, %s22
        %v307 = vld [vmem:[%s304] sm:$0xff]
        %v308 = vld [vmem:[%s304 + $0x8] sm:$0xff]
        %v309 = vld [vmem:[%s1] sm:$0xff]
        %v310 = vld [vmem:[%s1 + $0x8] sm:$0xff]
        %v311 = vld [vmem:[%s1 + $0x10] sm:$0xff]
        %v312 = vld [vmem:[%s1 + $0x18] sm:$0xff]
        %v313 = vld [vmem:[%s1 + $0x20] sm:$0xff]
        %v314 = vld [vmem:[%s1 + $0x28] sm:$0xff]
        %v315 = vld [vmem:[%s1 + $0x30] sm:$0xff]
        %v316 = vld [vmem:[%s1 + $0x38] sm:$0xff]
        %v317 = vld [vmem:[%s1 + $0x40] sm:$0xff]
        %v318 = vld [vmem:[%s1 + $0x48] sm:$0xff]
        %v319 = vld [vmem:[%s1 + $0x50] sm:$0xff]
        %v320 = vld [vmem:[%s1 + $0x58] sm:$0xff]
        %v321 = vld [vmem:[%s1 + $0x60] sm:$0xff]
        %v322 = vld [vmem:[%s1 + $0x68] sm:$0xff]
        %v323 = vld [vmem:[%s1 + $0x70] sm:$0xff]
        %v324 = vld [vmem:[%s1 + $0x78] sm:$0xff]
        %325 = vmatprep.subr.mxu0 0.0
        %326 = vmatpush1.msra.mxu0 %v309
        %327 = vmatprep.subr.mxu0 0.0
        %328 = vmatpush1.msra.mxu0 %v310
        %329 = vmatprep.subr.mxu0 0.0
        %330 = vmatpush1.msra.mxu0 %v311
        %331 = vmatprep.subr.mxu0 0.0
        %332 = vmatpush1.msra.mxu0 %v312
        %333 = vmatprep.subr.mxu0 0.0
        %334 = vmatpush1.msra.mxu0 %v313
        %335 = vmatprep.subr.mxu0 0.0
        %336 = vmatpush1.msra.mxu0 %v314
        %337 = vmatprep.subr.mxu0 0.0
        %338 = vmatpush1.msra.mxu0 %v315
        %339 = vmatprep.subr.mxu0 0.0
        %340 = vmatpush1.msra.mxu0 %v316
        %341 = vmatprep.subr.mxu0 0.0
        %342 = vmatpush1.msra.mxu0 %v317
        %343 = vmatprep.subr.mxu0 0.0
        %344 = vmatpush1.msra.mxu0 %v318
        %345 = vmatprep.subr.mxu0 0.0
        %346 = vmatpush1.msra.mxu0 %v319
        %347 = vmatprep.subr.mxu0 0.0
        %348 = vmatpush1.msra.mxu0 %v320
        %349 = vmatprep.subr.mxu0 0.0
        %350 = vmatpush1.msra.mxu0 %v321
        %351 = vmatprep.subr.mxu0 0.0
        %352 = vmatpush1.msra.mxu0 %v322
        %353 = vmatprep.subr.mxu0 0.0
        %354 = vmatpush1.msra.mxu0 %v323
        %355 = vmatprep.subr.mxu0 0.0
        %356 = vmatpush1.msra.mxu0 %v324
        %357 = vmatprep.subr.mxu0 0.0
        %358 = vmatpush1.msra.mxu0 0.0
        %359 = vmatprep.subr.mxu0 0.0
        %360 = vmatpush1.msra.mxu0 0.0
        %361 = vmatprep.subr.mxu0 0.0
        %362 = vmatpush1.msra.mxu0 0.0
        %363 = vmatprep.subr.mxu0 0.0
        %364 = vmatpush1.msra.mxu0 0.0
        %365 = vmatprep.subr.mxu0 0.0
        %366 = vmatpush1.msra.mxu0 0.0
        %367 = vmatprep.subr.mxu0 0.0
        %368 = vmatpush1.msra.mxu0 0.0
        %369 = vmatprep.subr.mxu0 0.0
        %370 = vmatpush1.msra.mxu0 0.0
        %371 = vmatprep.subr.mxu0 0.0
        %372 = vmatpush1.msra.mxu0 0.0
        %373 = vmatprep.subr.mxu0 0.0
        %374 = vmatpush1.msra.mxu0 0.0
        %375 = vmatprep.subr.mxu0 0.0
        %376 = vmatpush1.msra.mxu0 0.0
        %377 = vmatprep.subr.mxu0 0.0
        %378 = vmatpush1.msra.mxu0 0.0
        %379 = vmatprep.subr.mxu0 0.0
        %380 = vmatpush1.msra.mxu0 0.0
        %381 = vmatprep.subr.mxu0 0.0
        %382 = vmatpush1.msra.mxu0 0.0
        %383 = vmatprep.subr.mxu0 0.0
        %384 = vmatpush1.msra.mxu0 0.0
        %385 = vmatprep.subr.mxu0 0.0
        %386 = vmatpush1.msra.mxu0 0.0
        %387 = vmatprep.subr.mxu0 0.0
        %388 = vmatpush1.msra.mxu0 0.0
        %389 = vmatprep.mubr.f32.mxu0 0.0
        %390 = vmatmul.mubr.f32.gmra.mrb[0].mxu0 %v307
        %v391 = vpop.f32.mrb[0].mxu0
        %v392 = vadd.f32 0.0, %v391
        %v393 = vpop.f32.mrb[0].mxu0
        %394 = vmatprep.mubr.f32.mxu0 0.0
        %395 = vmatmul.mubr.f32.gmra.mrb[0].mxu0 %v308
        %v396 = vpop.f32.mrb[0].mxu0
        %v397 = vadd.f32 0.0, %v396
        %v398 = vpop.f32.mrb[0].mxu0
        %399 = vdwg.mxu0
        %v400 = vld [vmem:[%s3] sm:$0x7]
        %v401 = vlaneseq
        %v402 = vshrl.u32 %v401, 7
        %v403 = vsub.s32 0, %v402
        %v404 = vrot.slane %v400, %v403
        %v405 = vmul.f32 %v392, %v404
        %v406 = vmul.f32 %v397, %v404
        %v407 = vlaneseq
        %v408 = vshrl.u32 %v407, 7
        %v409 = vsub.s32 1, %v408
        %v410 = vrot.slane %v400, %v409
        %v411 = vmul.f32 %v392, %v410
        %v412 = vmul.f32 %v397, %v410
        %v413 = vlaneseq
        %v414 = vshrl.u32 %v413, 7
        %v415 = vsub.s32 2, %v414
        %v416 = vrot.slane %v400, %v415
        %v417 = vmul.f32 %v392, %v416
        %v418 = vmul.f32 %v397, %v416
        %v419 = vld [vmem:[%s2] sm:$0xff]
        %v420 = vld [vmem:[%s2 + $0x8] sm:$0xff]
        %v421 = vld [vmem:[%s2 + $0x10] sm:$0xff]
        %v422 = vld [vmem:[%s2 + $0x18] sm:$0xff]
        %v423 = vld [vmem:[%s4] sm:$0xff]
        %v424 = vld [vmem:[%s4 + $0x8] sm:$0xff]
        %v425 = vld [vmem:[%s4 + $0x10] sm:$0xff]
        %v426 = vld [vmem:[%s4 + $0x18] sm:$0xff]
        %vm427 = vcmask 392192
        %v429 = vsel %vm427, %v419, 0
        %v432 = vsel %vm427, %v420, 0
        %v435 = vsel %vm427, %v421, 0
        %v438 = vsel %vm427, %v422, 0
        %440 = vmatprep.subr.mxu0 0.0
        %441 = vmatpush1.msra.mxu0 %v405
        %442 = vmatprep.subr.mxu0 0.0
        %443 = vmatpush1.msra.mxu0 %v406
        %444 = vmatprep.subr.mxu0 0.0
        %445 = vmatpush1.msra.mxu0 %v411
        %446 = vmatprep.subr.mxu0 0.0
        %447 = vmatpush1.msra.mxu0 %v412
        %448 = vmatprep.subr.mxu0 0.0
        %449 = vmatpush1.msra.mxu0 %v417
        %450 = vmatprep.subr.mxu0 0.0
        %451 = vmatpush1.msra.mxu0 %v418
        %452 = vmatprep.subr.mxu0 0.0
        %453 = vmatpush1.msra.mxu0 0.0
        %454 = vmatprep.subr.mxu0 0.0
        %455 = vmatpush1.msra.mxu0 0.0
        %456 = vmatprep.subr.mxu0 0.0
        %457 = vmatpush1.msra.mxu0 0.0
        %458 = vmatprep.subr.mxu0 0.0
        %459 = vmatpush1.msra.mxu0 0.0
        %460 = vmatprep.subr.mxu0 0.0
        %461 = vmatpush1.msra.mxu0 0.0
        %462 = vmatprep.subr.mxu0 0.0
        %463 = vmatpush1.msra.mxu0 0.0
        %464 = vmatprep.subr.mxu0 0.0
        %465 = vmatpush1.msra.mxu0 0.0
        %466 = vmatprep.subr.mxu0 0.0
        %467 = vmatpush1.msra.mxu0 0.0
        %468 = vmatprep.subr.mxu0 0.0
        %469 = vmatpush1.msra.mxu0 0.0
        %470 = vmatprep.subr.mxu0 0.0
        %471 = vmatpush1.msra.mxu0 0.0
        %472 = vmatprep.subr.mxu0 0.0
        %473 = vmatpush1.msra.mxu0 0.0
        %474 = vmatprep.subr.mxu0 0.0
        %475 = vmatpush1.msra.mxu0 0.0
        %476 = vmatprep.subr.mxu0 0.0
        %477 = vmatpush1.msra.mxu0 0.0
        %478 = vmatprep.subr.mxu0 0.0
        %479 = vmatpush1.msra.mxu0 0.0
        %480 = vmatprep.subr.mxu0 0.0
        %481 = vmatpush1.msra.mxu0 0.0
        %482 = vmatprep.subr.mxu0 0.0
        %483 = vmatpush1.msra.mxu0 0.0
        %484 = vmatprep.subr.mxu0 0.0
        %485 = vmatpush1.msra.mxu0 0.0
        %486 = vmatprep.subr.mxu0 0.0
        %487 = vmatpush1.msra.mxu0 0.0
        %488 = vmatprep.subr.mxu0 0.0
        %489 = vmatpush1.msra.mxu0 0.0
        %490 = vmatprep.subr.mxu0 0.0
        %491 = vmatpush1.msra.mxu0 0.0
        %492 = vmatprep.subr.mxu0 0.0
        %493 = vmatpush1.msra.mxu0 0.0
        %494 = vmatprep.subr.mxu0 0.0
        %495 = vmatpush1.msra.mxu0 0.0
        %496 = vmatprep.subr.mxu0 0.0
        %497 = vmatpush1.msra.mxu0 0.0
        %498 = vmatprep.subr.mxu0 0.0
        %499 = vmatpush1.msra.mxu0 0.0
        %500 = vmatprep.subr.mxu0 0.0
        %501 = vmatpush1.msra.mxu0 0.0
        %502 = vmatprep.subr.mxu0 0.0
        %503 = vmatpush1.msra.mxu0 0.0
        %504 = vmatprep.mubr.f32.mxu0 0.0
        %505 = vmatmul.mubr.f32.gmra.mrb[0].mxu0 %v429
        %v506 = vpop.f32.mrb[0].mxu0
        %v507 = vadd.f32 %v423, %v506
        %v508 = vpop.f32.mrb[0].mxu0
        %509 = vmatprep.mubr.f32.mxu0 0.0
        %510 = vmatmul.mubr.f32.gmra.mrb[0].mxu0 %v432
        %v511 = vpop.f32.mrb[0].mxu0
        %v512 = vadd.f32 %v424, %v511
        %v513 = vpop.f32.mrb[0].mxu0
        %514 = vmatprep.mubr.f32.mxu0 0.0
        %515 = vmatmul.mubr.f32.gmra.mrb[0].mxu0 %v435
        %v516 = vpop.f32.mrb[0].mxu0
        %v517 = vadd.f32 %v425, %v516
        %v518 = vpop.f32.mrb[0].mxu0
        %519 = vmatprep.mubr.f32.mxu0 0.0
        %520 = vmatmul.mubr.f32.gmra.mrb[0].mxu0 %v438
        %v521 = vpop.f32.mrb[0].mxu0
        %v522 = vadd.f32 %v426, %v521
        %v523 = vpop.f32.mrb[0].mxu0
        %524 = vdwg.mxu0
        %v525 = vmax.f32 %v507, 0.0
        %v526 = vmax.f32 %v512, 0.0
        %v527 = vmax.f32 %v517, 0.0
        %v528 = vmax.f32 %v522, 0.0
        %v529 = vld [vmem:[%s5] sm:$0xff]
        %v530 = vld [vmem:[%s5 + $0x8] sm:$0xff]
        %v531 = vld [vmem:[%s5 + $0x10] sm:$0xff]
        %v532 = vld [vmem:[%s5 + $0x18] sm:$0xff]
        %v533 = vld [vmem:[%s5 + $0x20] sm:$0xff]
        %v534 = vld [vmem:[%s5 + $0x28] sm:$0xff]
        %v535 = vld [vmem:[%s5 + $0x30] sm:$0xff]
        %v536 = vld [vmem:[%s5 + $0x38] sm:$0xff]
        %v537 = vld [vmem:[%s5 + $0x40] sm:$0xff]
        %v538 = vld [vmem:[%s5 + $0x48] sm:$0xff]
        %v539 = vld [vmem:[%s5 + $0x50] sm:$0xff]
        %v540 = vld [vmem:[%s5 + $0x58] sm:$0xff]
        %vm541 = vcmask 261120
        %v543 = vsel %vm541, %v529, 0
        %v546 = vsel %vm541, %v530, 0
        %v549 = vsel %vm541, %v531, 0
        %v552 = vsel %vm541, %v532, 0
        %v555 = vsel %vm541, %v533, 0
        %v558 = vsel %vm541, %v534, 0
        %v561 = vsel %vm541, %v535, 0
        %v564 = vsel %vm541, %v536, 0
        %v567 = vsel %vm541, %v537, 0
        %v570 = vsel %vm541, %v538, 0
        %v573 = vsel %vm541, %v539, 0
        %v576 = vsel %vm541, %v540, 0
        %578 = vmatprep.subr.mxu0 0.0
        %579 = vmatpush1.msra.mxu0 %v525
        %580 = vmatprep.subr.mxu0 0.0
        %581 = vmatpush1.msra.mxu0 %v526
        %582 = vmatprep.subr.mxu0 0.0
        %583 = vmatpush1.msra.mxu0 %v527
        %584 = vmatprep.subr.mxu0 0.0
        %585 = vmatpush1.msra.mxu0 %v528
        %586 = vmatprep.subr.mxu0 0.0
        %587 = vmatpush1.msra.mxu0 0.0
        %588 = vmatprep.subr.mxu0 0.0
        %589 = vmatpush1.msra.mxu0 0.0
        %590 = vmatprep.subr.mxu0 0.0
        %591 = vmatpush1.msra.mxu0 0.0
        %592 = vmatprep.subr.mxu0 0.0
        %593 = vmatpush1.msra.mxu0 0.0
        %594 = vmatprep.subr.mxu0 0.0
        %595 = vmatpush1.msra.mxu0 0.0
        %596 = vmatprep.subr.mxu0 0.0
        %597 = vmatpush1.msra.mxu0 0.0
        %598 = vmatprep.subr.mxu0 0.0
        %599 = vmatpush1.msra.mxu0 0.0
        %600 = vmatprep.subr.mxu0 0.0
        %601 = vmatpush1.msra.mxu0 0.0
        %602 = vmatprep.subr.mxu0 0.0
        %603 = vmatpush1.msra.mxu0 0.0
        %604 = vmatprep.subr.mxu0 0.0
        %605 = vmatpush1.msra.mxu0 0.0
        %606 = vmatprep.subr.mxu0 0.0
        %607 = vmatpush1.msra.mxu0 0.0
        %608 = vmatprep.subr.mxu0 0.0
        %609 = vmatpush1.msra.mxu0 0.0
        %610 = vmatprep.subr.mxu0 0.0
        %611 = vmatpush1.msra.mxu0 0.0
        %612 = vmatprep.subr.mxu0 0.0
        %613 = vmatpush1.msra.mxu0 0.0
        %614 = vmatprep.subr.mxu0 0.0
        %615 = vmatpush1.msra.mxu0 0.0
        %616 = vmatprep.subr.mxu0 0.0
        %617 = vmatpush1.msra.mxu0 0.0
        %618 = vmatprep.subr.mxu0 0.0
        %619 = vmatpush1.msra.mxu0 0.0
        %620 = vmatprep.subr.mxu0 0.0
        %621 = vmatpush1.msra.mxu0 0.0
        %622 = vmatprep.subr.mxu0 0.0
        %623 = vmatpush1.msra.mxu0 0.0
        %624 = vmatprep.subr.mxu0 0.0
        %625 = vmatpush1.msra.mxu0 0.0
        %626 = vmatprep.subr.mxu0 0.0
        %627 = vmatpush1.msra.mxu0 0.0
        %628 = vmatprep.subr.mxu0 0.0
        %629 = vmatpush1.msra.mxu0 0.0
        %630 = vmatprep.subr.mxu0 0.0
        %631 = vmatpush1.msra.mxu0 0.0
        %632 = vmatprep.subr.mxu0 0.0
        %633 = vmatpush1.msra.mxu0 0.0
        %634 = vmatprep.subr.mxu0 0.0
        %635 = vmatpush1.msra.mxu0 0.0
        %636 = vmatprep.subr.mxu0 0.0
        %637 = vmatpush1.msra.mxu0 0.0
        %638 = vmatprep.subr.mxu0 0.0
        %639 = vmatpush1.msra.mxu0 0.0
        %640 = vmatprep.subr.mxu0 0.0
        %641 = vmatpush1.msra.mxu0 0.0
        %642 = vmatprep.mubr.f32.mxu0 0.0
        %643 = vmatmul.mubr.f32.gmra.mrb[0].mxu0 %v543
        %v644 = vpop.f32.mrb[0].mxu0
        %v645 = vadd.f32 0.0, %v644
        %v646 = vpop.f32.mrb[0].mxu0
        %647 = vmatprep.mubr.f32.mxu0 0.0
        %648 = vmatmul.mubr.f32.gmra.mrb[0].mxu0 %v546
        %v649 = vpop.f32.mrb[0].mxu0
        %v650 = vadd.f32 0.0, %v649
        %v651 = vpop.f32.mrb[0].mxu0
        %652 = vmatprep.mubr.f32.mxu0 0.0
        %653 = vmatmul.mubr.f32.gmra.mrb[0].mxu0 %v549
        %v654 = vpop.f32.mrb[0].mxu0
        %v655 = vadd.f32 0.0, %v654
        %v656 = vpop.f32.mrb[0].mxu0
        %657 = vmatprep.mubr.f32.mxu0 0.0
        %658 = vmatmul.mubr.f32.gmra.mrb[0].mxu0 %v552
        %v659 = vpop.f32.mrb[0].mxu0
        %v660 = vadd.f32 0.0, %v659
        %v661 = vpop.f32.mrb[0].mxu0
        %662 = vmatprep.mubr.f32.mxu0 0.0
        %663 = vmatmul.mubr.f32.gmra.mrb[0].mxu0 %v555
        %v664 = vpop.f32.mrb[0].mxu0
        %v665 = vadd.f32 0.0, %v664
        %v666 = vpop.f32.mrb[0].mxu0
        %667 = vmatprep.mubr.f32.mxu0 0.0
        %668 = vmatmul.mubr.f32.gmra.mrb[0].mxu0 %v558
        %v669 = vpop.f32.mrb[0].mxu0
        %v670 = vadd.f32 0.0, %v669
        %v671 = vpop.f32.mrb[0].mxu0
        %672 = vmatprep.mubr.f32.mxu0 0.0
        %673 = vmatmul.mubr.f32.gmra.mrb[0].mxu0 %v561
        %v674 = vpop.f32.mrb[0].mxu0
        %v675 = vadd.f32 0.0, %v674
        %v676 = vpop.f32.mrb[0].mxu0
        %677 = vmatprep.mubr.f32.mxu0 0.0
        %678 = vmatmul.mubr.f32.gmra.mrb[0].mxu0 %v564
        %v679 = vpop.f32.mrb[0].mxu0
        %v680 = vadd.f32 0.0, %v679
        %v681 = vpop.f32.mrb[0].mxu0
        %682 = vmatprep.mubr.f32.mxu0 0.0
        %683 = vmatmul.mubr.f32.gmra.mrb[0].mxu0 %v567
        %v684 = vpop.f32.mrb[0].mxu0
        %v685 = vadd.f32 0.0, %v684
        %v686 = vpop.f32.mrb[0].mxu0
        %687 = vmatprep.mubr.f32.mxu0 0.0
        %688 = vmatmul.mubr.f32.gmra.mrb[0].mxu0 %v570
        %v689 = vpop.f32.mrb[0].mxu0
        %v690 = vadd.f32 0.0, %v689
        %v691 = vpop.f32.mrb[0].mxu0
        %692 = vmatprep.mubr.f32.mxu0 0.0
        %693 = vmatmul.mubr.f32.gmra.mrb[0].mxu0 %v573
        %v694 = vpop.f32.mrb[0].mxu0
        %v695 = vadd.f32 0.0, %v694
        %v696 = vpop.f32.mrb[0].mxu0
        %697 = vmatprep.mubr.f32.mxu0 0.0
        %698 = vmatmul.mubr.f32.gmra.mrb[0].mxu0 %v576
        %v699 = vpop.f32.mrb[0].mxu0
        %v700 = vadd.f32 0.0, %v699
        %v701 = vpop.f32.mrb[0].mxu0
        %702 = vdwg.mxu0
        %v703 = vld [vmem:[%s6] sm:$0x7f]
        %s704 = scalar_lea.vmem %s6, 8
        %v705 = vld [vmem:[%s704] sm:$0x7f]
        %vm706 = vcmask 56320
        %v708 = vsel %vm706, %v665, 0
        %v711 = vsel %vm706, %v670, 0
        %v714 = vsel %vm706, %v675, 0
        %v717 = vsel %vm706, %v680, 0
        %vm719 = vcmask 1046528
        %v721 = vsel %vm719, %v705, 0
        %723 = vmatprep.subr.mxu0 0.0
        %724 = vmatpush1.msra.mxu0 %v721
        %725 = vmatprep.subr.mxu0 0.0
        %726 = vmatpush1.msra.mxu0 0.0
        %727 = vmatprep.subr.mxu0 0.0
        %728 = vmatpush1.msra.mxu0 0.0
        %729 = vmatprep.subr.mxu0 0.0
        %730 = vmatpush1.msra.mxu0 0.0
        %731 = vmatprep.subr.mxu0 0.0
        %732 = vmatpush1.msra.mxu0 0.0
        %733 = vmatprep.subr.mxu0 0.0
        %734 = vmatpush1.msra.mxu0 0.0
        %735 = vmatprep.subr.mxu0 0.0
        %736 = vmatpush1.msra.mxu0 0.0
        %737 = vmatprep.subr.mxu0 0.0
        %738 = vmatpush1.msra.mxu0 0.0
        %739 = vmatprep.subr.mxu0 0.0
        %740 = vmatpush1.msra.mxu0 0.0
        %741 = vmatprep.subr.mxu0 0.0
        %742 = vmatpush1.msra.mxu0 0.0
        %743 = vmatprep.subr.mxu0 0.0
        %744 = vmatpush1.msra.mxu0 0.0
        %745 = vmatprep.subr.mxu0 0.0
        %746 = vmatpush1.msra.mxu0 0.0
        %747 = vmatprep.subr.mxu0 0.0
        %748 = vmatpush1.msra.mxu0 0.0
        %749 = vmatprep.subr.mxu0 0.0
        %750 = vmatpush1.msra.mxu0 0.0
        %751 = vmatprep.subr.mxu0 0.0
        %752 = vmatpush1.msra.mxu0 0.0
        %753 = vmatprep.subr.mxu0 0.0
        %754 = vmatpush1.msra.mxu0 0.0
        %755 = vmatprep.subr.mxu0 0.0
        %756 = vmatpush1.msra.mxu0 0.0
        %757 = vmatprep.subr.mxu0 0.0
        %758 = vmatpush1.msra.mxu0 0.0
        %759 = vmatprep.subr.mxu0 0.0
        %760 = vmatpush1.msra.mxu0 0.0
        %761 = vmatprep.subr.mxu0 0.0
        %762 = vmatpush1.msra.mxu0 0.0
        %763 = vmatprep.subr.mxu0 0.0
        %764 = vmatpush1.msra.mxu0 0.0
        %765 = vmatprep.subr.mxu0 0.0
        %766 = vmatpush1.msra.mxu0 0.0
        %767 = vmatprep.subr.mxu0 0.0
        %768 = vmatpush1.msra.mxu0 0.0
        %769 = vmatprep.subr.mxu0 0.0
        %770 = vmatpush1.msra.mxu0 0.0
        %771 = vmatprep.subr.mxu0 0.0
        %772 = vmatpush1.msra.mxu0 0.0
        %773 = vmatprep.subr.mxu0 0.0
        %774 = vmatpush1.msra.mxu0 0.0
        %775 = vmatprep.subr.mxu0 0.0
        %776 = vmatpush1.msra.mxu0 0.0
        %777 = vmatprep.subr.mxu0 0.0
        %778 = vmatpush1.msra.mxu0 0.0
        %779 = vmatprep.subr.mxu0 0.0
        %780 = vmatpush1.msra.mxu0 0.0
        %781 = vmatprep.subr.mxu0 0.0
        %782 = vmatpush1.msra.mxu0 0.0
        %783 = vmatprep.subr.mxu0 0.0
        %784 = vmatpush1.msra.mxu0 0.0
        %785 = vmatprep.subr.mxu0 0.0
        %786 = vmatpush1.msra.mxu0 0.0
        %787 = vmatprep.mubr.f32.mxu0 0.0
        %788 = vmatmul.mubr.f32.gmra.mrb[0].mxu0 %v708
        %v789 = vpop.f32.mrb[0].mxu0
        %v790 = vadd.f32 0.0, %v789
        %v791 = vpop.f32.mrb[0].mxu0
        %792 = vmatprep.mubr.f32.mxu0 0.0
        %793 = vmatmul.mubr.f32.gmra.mrb[0].mxu0 %v711
        %v794 = vpop.f32.mrb[0].mxu0
        %v795 = vadd.f32 0.0, %v794
        %v796 = vpop.f32.mrb[0].mxu0
        %797 = vmatprep.mubr.f32.mxu0 0.0
        %798 = vmatmul.mubr.f32.gmra.mrb[0].mxu0 %v714
        %v799 = vpop.f32.mrb[0].mxu0
        %v800 = vadd.f32 0.0, %v799
        %v801 = vpop.f32.mrb[0].mxu0
        %802 = vmatprep.mubr.f32.mxu0 0.0
        %803 = vmatmul.mubr.f32.gmra.mrb[0].mxu0 %v717
        %v804 = vpop.f32.mrb[0].mxu0
        %v805 = vadd.f32 0.0, %v804
        %v806 = vpop.f32.mrb[0].mxu0
        %807 = vdwg.mxu0
        %v809 = vsel %vm706, %v645, 0
        %v812 = vsel %vm706, %v650, 0
        %v815 = vsel %vm706, %v655, 0
        %v818 = vsel %vm706, %v660, 0
        %v821 = vsel %vm719, %v703, 0
        %823 = vmatprep.subr.mxu0 0.0
        %824 = vmatpush1.msra.mxu0 %v821
        %825 = vmatprep.subr.mxu0 0.0
        %826 = vmatpush1.msra.mxu0 0.0
        %827 = vmatprep.subr.mxu0 0.0
        %828 = vmatpush1.msra.mxu0 0.0
        %829 = vmatprep.subr.mxu0 0.0
        %830 = vmatpush1.msra.mxu0 0.0
        %831 = vmatprep.subr.mxu0 0.0
        %832 = vmatpush1.msra.mxu0 0.0
        %833 = vmatprep.subr.mxu0 0.0
        %834 = vmatpush1.msra.mxu0 0.0
        %835 = vmatprep.subr.mxu0 0.0
        %836 = vmatpush1.msra.mxu0 0.0
        %837 = vmatprep.subr.mxu0 0.0
        %838 = vmatpush1.msra.mxu0 0.0
        %839 = vmatprep.subr.mxu0 0.0
        %840 = vmatpush1.msra.mxu0 0.0
        %841 = vmatprep.subr.mxu0 0.0
        %842 = vmatpush1.msra.mxu0 0.0
        %843 = vmatprep.subr.mxu0 0.0
        %844 = vmatpush1.msra.mxu0 0.0
        %845 = vmatprep.subr.mxu0 0.0
        %846 = vmatpush1.msra.mxu0 0.0
        %847 = vmatprep.subr.mxu0 0.0
        %848 = vmatpush1.msra.mxu0 0.0
        %849 = vmatprep.subr.mxu0 0.0
        %850 = vmatpush1.msra.mxu0 0.0
        %851 = vmatprep.subr.mxu0 0.0
        %852 = vmatpush1.msra.mxu0 0.0
        %853 = vmatprep.subr.mxu0 0.0
        %854 = vmatpush1.msra.mxu0 0.0
        %855 = vmatprep.subr.mxu0 0.0
        %856 = vmatpush1.msra.mxu0 0.0
        %857 = vmatprep.subr.mxu0 0.0
        %858 = vmatpush1.msra.mxu0 0.0
        %859 = vmatprep.subr.mxu0 0.0
        %860 = vmatpush1.msra.mxu0 0.0
        %861 = vmatprep.subr.mxu0 0.0
        %862 = vmatpush1.msra.mxu0 0.0
        %863 = vmatprep.subr.mxu0 0.0
        %864 = vmatpush1.msra.mxu0 0.0
        %865 = vmatprep.subr.mxu0 0.0
        %866 = vmatpush1.msra.mxu0 0.0
        %867 = vmatprep.subr.mxu0 0.0
        %868 = vmatpush1.msra.mxu0 0.0
        %869 = vmatprep.subr.mxu0 0.0
        %870 = vmatpush1.msra.mxu0 0.0
        %871 = vmatprep.subr.mxu0 0.0
        %872 = vmatpush1.msra.mxu0 0.0
        %873 = vmatprep.subr.mxu0 0.0
        %874 = vmatpush1.msra.mxu0 0.0
        %875 = vmatprep.subr.mxu0 0.0
        %876 = vmatpush1.msra.mxu0 0.0
        %877 = vmatprep.subr.mxu0 0.0
        %878 = vmatpush1.msra.mxu0 0.0
        %879 = vmatprep.subr.mxu0 0.0
        %880 = vmatpush1.msra.mxu0 0.0
        %881 = vmatprep.subr.mxu0 0.0
        %882 = vmatpush1.msra.mxu0 0.0
        %883 = vmatprep.subr.mxu0 0.0
        %884 = vmatpush1.msra.mxu0 0.0
        %885 = vmatprep.subr.mxu0 0.0
        %886 = vmatpush1.msra.mxu0 0.0
        %887 = vmatprep.mubr.f32.mxu0 0.0
        %888 = vmatmul.mubr.f32.gmra.mrb[0].mxu0 %v809
        %v889 = vpop.f32.mrb[0].mxu0
        %v890 = vadd.f32 %v790, %v889
        %v891 = vpop.f32.mrb[0].mxu0
        %892 = vmatprep.mubr.f32.mxu0 0.0
        %893 = vmatmul.mubr.f32.gmra.mrb[0].mxu0 %v812
        %v894 = vpop.f32.mrb[0].mxu0
        %v895 = vadd.f32 %v795, %v894
        %v896 = vpop.f32.mrb[0].mxu0
        %897 = vmatprep.mubr.f32.mxu0 0.0
        %898 = vmatmul.mubr.f32.gmra.mrb[0].mxu0 %v815
        %v899 = vpop.f32.mrb[0].mxu0
        %v900 = vadd.f32 %v800, %v899
        %v901 = vpop.f32.mrb[0].mxu0
        %902 = vmatprep.mubr.f32.mxu0 0.0
        %903 = vmatmul.mubr.f32.gmra.mrb[0].mxu0 %v818
        %v904 = vpop.f32.mrb[0].mxu0
        %v905 = vadd.f32 %v805, %v904
        %v906 = vpop.f32.mrb[0].mxu0
        %907 = vdwg.mxu0
        %s908 = scalar_lea.vmem %s6, 16
        %v909 = vld [vmem:[%s908] sm:$0x7f]
        %v911 = vsel %vm706, %v685, 0
        %v914 = vsel %vm706, %v690, 0
        %v917 = vsel %vm706, %v695, 0
        %v920 = vsel %vm706, %v700, 0
        %v923 = vsel %vm719, %v909, 0
        %925 = vmatprep.subr.mxu0 0.0
        %926 = vmatpush1.msra.mxu0 %v923
        %927 = vmatprep.subr.mxu0 0.0
        %928 = vmatpush1.msra.mxu0 0.0
        %929 = vmatprep.subr.mxu0 0.0
        %930 = vmatpush1.msra.mxu0 0.0
        %931 = vmatprep.subr.mxu0 0.0
        %932 = vmatpush1.msra.mxu0 0.0
        %933 = vmatprep.subr.mxu0 0.0
        %934 = vmatpush1.msra.mxu0 0.0
        %935 = vmatprep.subr.mxu0 0.0
        %936 = vmatpush1.msra.mxu0 0.0
        %937 = vmatprep.subr.mxu0 0.0
        %938 = vmatpush1.msra.mxu0 0.0
        %939 = vmatprep.subr.mxu0 0.0
        %940 = vmatpush1.msra.mxu0 0.0
        %941 = vmatprep.subr.mxu0 0.0
        %942 = vmatpush1.msra.mxu0 0.0
        %943 = vmatprep.subr.mxu0 0.0
        %944 = vmatpush1.msra.mxu0 0.0
        %945 = vmatprep.subr.mxu0 0.0
        %946 = vmatpush1.msra.mxu0 0.0
        %947 = vmatprep.subr.mxu0 0.0
        %948 = vmatpush1.msra.mxu0 0.0
        %949 = vmatprep.subr.mxu0 0.0
        %950 = vmatpush1.msra.mxu0 0.0
        %951 = vmatprep.subr.mxu0 0.0
        %952 = vmatpush1.msra.mxu0 0.0
        %953 = vmatprep.subr.mxu0 0.0
        %954 = vmatpush1.msra.mxu0 0.0
        %955 = vmatprep.subr.mxu0 0.0
        %956 = vmatpush1.msra.mxu0 0.0
        %957 = vmatprep.subr.mxu0 0.0
        %958 = vmatpush1.msra.mxu0 0.0
        %959 = vmatprep.subr.mxu0 0.0
        %960 = vmatpush1.msra.mxu0 0.0
        %961 = vmatprep.subr.mxu0 0.0
        %962 = vmatpush1.msra.mxu0 0.0
        %963 = vmatprep.subr.mxu0 0.0
        %964 = vmatpush1.msra.mxu0 0.0
        %965 = vmatprep.subr.mxu0 0.0
        %966 = vmatpush1.msra.mxu0 0.0
        %967 = vmatprep.subr.mxu0 0.0
        %968 = vmatpush1.msra.mxu0 0.0
        %969 = vmatprep.subr.mxu0 0.0
        %970 = vmatpush1.msra.mxu0 0.0
        %971 = vmatprep.subr.mxu0 0.0
        %972 = vmatpush1.msra.mxu0 0.0
        %973 = vmatprep.subr.mxu0 0.0
        %974 = vmatpush1.msra.mxu0 0.0
        %975 = vmatprep.subr.mxu0 0.0
        %976 = vmatpush1.msra.mxu0 0.0
        %977 = vmatprep.subr.mxu0 0.0
        %978 = vmatpush1.msra.mxu0 0.0
        %979 = vmatprep.subr.mxu0 0.0
        %980 = vmatpush1.msra.mxu0 0.0
        %981 = vmatprep.subr.mxu0 0.0
        %982 = vmatpush1.msra.mxu0 0.0
        %983 = vmatprep.subr.mxu0 0.0
        %984 = vmatpush1.msra.mxu0 0.0
        %985 = vmatprep.subr.mxu0 0.0
        %986 = vmatpush1.msra.mxu0 0.0
        %987 = vmatprep.subr.mxu0 0.0
        %988 = vmatpush1.msra.mxu0 0.0
        %989 = vmatprep.mubr.f32.mxu0 0.0
        %990 = vmatmul.mubr.f32.gmra.mrb[0].mxu0 %v911
        %v991 = vpop.f32.mrb[0].mxu0
        %v992 = vadd.f32 0.0, %v991
        %v993 = vpop.f32.mrb[0].mxu0
        %994 = vmatprep.mubr.f32.mxu0 0.0
        %995 = vmatmul.mubr.f32.gmra.mrb[0].mxu0 %v914
        %v996 = vpop.f32.mrb[0].mxu0
        %v997 = vadd.f32 0.0, %v996
        %v998 = vpop.f32.mrb[0].mxu0
        %999 = vmatprep.mubr.f32.mxu0 0.0
        %1000 = vmatmul.mubr.f32.gmra.mrb[0].mxu0 %v917
        %v1001 = vpop.f32.mrb[0].mxu0
        %v1002 = vadd.f32 0.0, %v1001
        %v1003 = vpop.f32.mrb[0].mxu0
        %1004 = vmatprep.mubr.f32.mxu0 0.0
        %1005 = vmatmul.mubr.f32.gmra.mrb[0].mxu0 %v920
        %v1006 = vpop.f32.mrb[0].mxu0
        %v1007 = vadd.f32 0.0, %v1006
        %v1008 = vpop.f32.mrb[0].mxu0
        %1009 = vdwg.mxu0
        %v1010 = vadd.f32 %v890, %v992
        %v1011 = vadd.f32 %v895, %v997
        %v1012 = vadd.f32 %v900, %v1002
        %v1013 = vadd.f32 %v905, %v1007
        %v1014 = vld [vmem:[%s7] sm:$0xff]
        %v1015 = vld [vmem:[%s7 + $0x8] sm:$0xff]
        %v1016 = vld [vmem:[%s7 + $0x10] sm:$0xff]
        %v1017 = vld [vmem:[%s7 + $0x18] sm:$0xff]
        %1019 = vset.pattern.permute.xlu0 0
        %1020 = vperm.xlu0 %1019, %v1014
        %v1021 = vpop.permute.xlu0 %1020
        %1024 = vset.pattern.permute.xlu0 0
        %1025 = vperm.xlu0 %1024, %v1015
        %v1026 = vpop.permute.xlu0 %1025
        %1029 = vset.pattern.permute.xlu0 0
        %1030 = vperm.xlu0 %1029, %v1016
        %v1031 = vpop.permute.xlu0 %1030
        %1034 = vset.pattern.permute.xlu0 0
        %1035 = vperm.xlu0 %1034, %v1017
        %v1036 = vpop.permute.xlu0 %1035
        %v1038 = vadd.f32 %v1010, %v1021
        %v1039 = vadd.f32 %v1011, %v1026
        %v1040 = vadd.f32 %v1012, %v1031
        %v1041 = vadd.f32 %v1013, %v1036
        %v1042 = vmax.f32 %v1038, 0.0
        %v1043 = vmax.f32 %v1039, 0.0
        %v1044 = vmax.f32 %v1040, 0.0
        %v1045 = vmax.f32 %v1041, 0.0
        %1046 = vst [vmem:[%s299] sm:$0xff] %v1042
        %1047 = vst [vmem:[%s299 + $0x8] sm:$0xff] %v1043
        %1048 = vst [vmem:[%s299 + $0x10] sm:$0xff] %v1044
        %1049 = vst [vmem:[%s299 + $0x18] sm:$0xff] %v1045
        %s1050 = sand.u32 %s203, 1
        %s1051 = scalar_lea.sflag [#allocation3], %s1050
        %s1052 = sand.u32 %s203, 1
        %s1053 = smul.addr %s1052, 32
        %s1054 = scalar_lea.vmem [#allocation2], %s1053
        // Predicated region
        $region53: #{tpu_custom_call.1} parent=51 // pred_check
          %p1055 = pneg %p213
        $region54: #{tpu_custom_call.1} parent=51 // pred_check_branch
          %1057 = sbr.rel (%p1055) target = $region56
        $region55: #{tpu_custom_call.1} parent=51 // pred_region
          %s1058 = smul.u32 4, %s22
          %s1060 = ssub.s32 512, 512
          %1061 = vsyncadd %s1051, %s1060
          %s1062 = smul.addr %s1058, 128
          %s1063 = scalar_lea.hbm %s8, %s1062
          %s1064 = sshll.u32 %s1054, 4
          %s1065 = int_to_ptr.vmem [resolvable:$true] %s1064
          %1070 = dma.vmem_to_hbm [thread:$0]  %s1065, 512, %s1063, %s1051, 128, 128, 8
        $region56: #{tpu_custom_call.1} parent=51 // pred_fallthru
          _
      $region52: #{tpu_custom_call.1} parent=5 // pred_fallthru
        _
      %p1071 = scmp.le.s32.totalorder 2, %s17
      // Predicated region
      $region57: #{tpu_custom_call.1} parent=5 // pred_check
        %p1072 = pneg %p1071
      $region58: #{tpu_custom_call.1} parent=5 // pred_check_branch
        %1074 = sbr.rel (%p1072) target = $region60
      $region59: #{tpu_custom_call.1} parent=5 // pred_region
        %s1075 = ssub.s32 %s17, 2
        // Predicated region
        $region61: #{tpu_custom_call.1} parent=59 // pred_check
          %p1076 = pneg %p219
        $region62: #{tpu_custom_call.1} parent=59 // pred_check_branch
          %1078 = sbr.rel (%p1076) target = $region64
        $region63: #{tpu_custom_call.1} parent=59 // pred_region
          %s1079 = sand.u32 %s204, 1
          %s1080 = scalar_lea.sflag [#allocation3], %s1079
          %s1081 = sand.u32 %s204, 1
          %s1082 = smul.addr %s1081, 32
          %s1083 = scalar_lea.vmem [#allocation2], %s1082
          %1084 = dma.done %s1080, 512
        $region64: #{tpu_custom_call.1} parent=59 // pred_fallthru
          _
      $region60: #{tpu_custom_call.1} parent=5 // pred_fallthru
        _
    $region6: #{tpu_custom_call.1} parent=1 // loop_footer
      %s21 = sadd.s32 1, %s17
    $region7: #{tpu_custom_call.1} parent=1 // loop_footer_branch
      %16 = sbr.rel target = $region3
    $region8: #{tpu_custom_call.1} parent=1 // loop_exit
      _
    %1085 = vsyncpa [#allocation3], 1
    %s1086 = scalar_lea.sflag [#allocation3], 1
    %1087 = vsyncpa %s1086, 1

</llo_original>
